<compile_context>
chip_gen: v7x
topology: tpu7x:2x2x1
jax: 0.10.0
libtpu: 0.0.40
codegen_flags: <defaults>
</compile_context>

<pallas_src>
import functools

import jax
import jax.numpy as jnp
from jax.experimental import pallas as pl
from jax.experimental.pallas import tpu as pltpu


def _swish_kernel(x_ref, o_ref, *, approx):
    x32 = x_ref[...].astype(jnp.float32)
    if approx:
        # One EUP transcendental (exp) + approx reciprocal (also EUP, nearly
        # free slot-wise) -- plenty of precision for sub-32-bit outputs.
        s = pl.reciprocal(1.0 + jnp.exp(-x32), approx=True)
    else:
        # Exact path (exp/recip on the EUP, handles +/-inf correctly).
        s = jax.nn.sigmoid(x32)
    o_ref[...] = (x32 * s).astype(o_ref.dtype)


def _num_tensorcores_per_chip():
    """Best-effort TC-per-chip count; only used for a tiny split heuristic."""
    try:
        kind = jax.devices()[0].device_kind.lower()
    except Exception:
        return 1
    if "lite" in kind or "v5e" in kind or "v6e" in kind:
        return 1
    if any(tag in kind for tag in ("v7", "7x", "v4", "v3", "v2")):
        return 2
    return 1


def swish(x, *, target_block_bytes=6 * 1024 * 1024, donate=False):
    """Elementwise Swish. Accepts any shape; computed in a Pallas TPU kernel."""
    orig_shape = x.shape
    dtype = x.dtype
    n = x.size
    if n == 0:
        return x

    itemsize = jnp.dtype(dtype).itemsize
    # Sublane tile: f32 -> 8 rows/vreg, 16-bit -> 16, 8-bit -> 32.
    sub = {1: 32, 2: 16}.get(itemsize, 8)
    approx = itemsize < 4  # exact sigmoid for f32, cheaper EUP path otherwise

    # --- Pick a lane-dense, copy-free [rows, lane] view ----------------------
    # Any lane that is a multiple of 128 and divides n works: the block shape
    # (tr, lane) satisfies the (sublane, 128) rule and a ragged final row-block
    # is masked automatically by Pallas.
    lane = None
    max_lane = min(n, 4096)
    for w in range(max_lane - (max_lane % 128), 127, -128):
        if n % w == 0:
            lane = w
            break

    if lane is not None:
        rows = n // lane
        x2d = x.reshape(rows, lane)  # metadata-only reshape, no HBM copy
        padded = False
    else:
        # Ragged size: pad the flat array up to a [rows, lane] slab.
        # TODO(synk): split into an aligned copy-free bulk + tiny tail to avoid
        # the extra pad/slice HBM round-trips on ragged sizes.
        lane = 512 if n >= 4096 else 128
        rows = -(-n // lane)
        x2d = jnp.pad(jnp.ravel(x), (0, rows * lane - n)).reshape(rows, lane)
        padded = True

    # --- Row tiling: ~target_block_bytes per block, multiple of `sub` --------
    tr = max(sub, (target_block_bytes // (lane * itemsize)) // sub * sub)
    if tr >= rows:
        tr = rows  # single block == full array dims (always a legal block)

    # On multi-TensorCore chips, aim for >=2 grid steps per core so each
    # core's DMA overlaps its compute. On 1-TC chips a forced split is pure
    # per-step overhead, so skip it.
    ncores = _num_tensorcores_per_chip()
    if ncores > 1:
        min_steps = 2 * ncores
        if pl.cdiv(rows, tr) < min_steps and rows >= min_steps * sub:
            tr = max(sub, (-(-(-(-rows // min_steps)) // sub)) * sub)
    grid = (pl.cdiv(rows, tr),)

    block_bytes = tr * lane * itemsize
    # Double-buffered in + out blocks (~4x block) plus headroom; stays well
    # under v7x's 64 MiB physical VMEM and raises v5e's 16 MiB scoped default.
    vmem_limit = min(max(32 << 20, 4 * block_bytes + (16 << 20)), 56 << 20)

    cost = pl.CostEstimate(
        flops=5 * n,
        transcendentals=n,
        bytes_accessed=2 * rows * lane * itemsize,
    )

    kernel = functools.partial(_swish_kernel, approx=approx)

    io_aliases = {0: 0} if (donate and not padded) else {}

    out2d = pl.pallas_call(
        kernel,
        out_shape=jax.ShapeDtypeStruct((rows, lane), dtype),
        grid_spec=pltpu.PrefetchScalarGridSpec(
            num_scalar_prefetch=0,
            grid=grid,
            in_specs=[pl.BlockSpec((tr, lane), lambda i: (i, 0))],
            out_specs=pl.BlockSpec((tr, lane), lambda i: (i, 0)),
        ),
        compiler_params=pltpu.CompilerParams(
            dimension_semantics=("parallel",),
            vmem_limit_bytes=vmem_limit,
        ),
        cost_estimate=cost,
        input_output_aliases=io_aliases,
    )(x2d)

    if padded:
        return out2d.reshape(-1)[:n].reshape(orig_shape)
    return out2d.reshape(orig_shape)


if __name__ == "__main__":
    key = jax.random.PRNGKey(0)
    # NCHW input, matching PyTorch convention: batch=2, channels=4, spatial=16x16
    x = jax.random.normal(key, (2, 4, 16, 16), dtype=jnp.float32)

    y = jax.block_until_ready(swish(x))

    # Sanity check against plain-JAX reference.
    y_ref = x * jax.nn.sigmoid(x)
    assert y.shape == x.shape and y.dtype == x.dtype
    assert jnp.max(jnp.abs(y - y_ref)) < 1e-6

    print("KERNEL_OK")
</pallas_src>

<mosaic_0001>
module attributes {stable_mosaic.version = 11 : i64} {
  func.func @_swish_kernel(%arg0: i32, %arg1: memref<1x2048xf32, #tpu.memory_space<vmem>>, %arg2: memref<1x2048xf32, #tpu.memory_space<vmem>>) attributes {dimension_semantics = [#tpu.dimension_semantics<parallel>], iteration_bounds = array<i64: 1>, scalar_prefetch = 0 : i64, scratch_operands = 0 : i64, tpu.core_type = #tpu.core_type<tc>, window_params = [{transform_indices = @transform_0, window_bounds = array<i64: 1, 2048>}, {transform_indices = @transform_1, window_bounds = array<i64: 1, 2048>}]} {
    %c0 = arith.constant 0 : index
    %c0_0 = arith.constant 0 : index
    %0 = vector.load %arg1[%c0, %c0_0] : memref<1x2048xf32, #tpu.memory_space<vmem>>, vector<1x2048xf32>
    %1 = arith.negf %0 : vector<1x2048xf32>
    %2 = math.exp %1 : vector<1x2048xf32>
    %cst = arith.constant 1.000000e+00 : f32
    %3 = vector.broadcast %cst : f32 to vector<1x2048xf32>
    %4 = arith.addf %3, %2 : vector<1x2048xf32>
    %5 = arith.divf %3, %4 : vector<1x2048xf32>
    %6 = arith.mulf %0, %5 : vector<1x2048xf32>
    %c0_1 = arith.constant 0 : index
    %c0_2 = arith.constant 0 : index
    %7 = vector.load %arg2[%c0_1, %c0_2] : memref<1x2048xf32, #tpu.memory_space<vmem>>, vector<1x2048xf32>
    tpu.vector_store %arg2[%c0_1, %c0_2], %6 {strides = array<i32>} : memref<1x2048xf32, #tpu.memory_space<vmem>>, vector<1x2048xf32>,
    return
  }
  func.func @transform_0(%arg0: i32) -> (i32, i32) {
    %c0_i32 = arith.constant 0 : i32
    %c0_i32_0 = arith.constant 0 : i32
    return %arg0, %c0_i32 : i32, i32
  }
  func.func @transform_1(%arg0: i32) -> (i32, i32) {
    %c0_i32 = arith.constant 0 : i32
    %c0_i32_0 = arith.constant 0 : i32
    return %arg0, %c0_i32 : i32, i32
  }
}

</mosaic_0001>

<llo_original>
// kernel: tpu_custom_call.1
$region0: #{tpu_custom_call.1}
  #allocation0 [shape = 'u32[]', space=smem, size = 0x4, offset = 0x4, fixed_abs, tag = 'smem constant byte address 0x4 - core index']
  #allocation1 [shape = 'u32[144,128]{1,0:T(1,128)}', space=vmem, size = 0x12000, scoped, tag = 'internal scratch']
  %s0 = inlined_call_operand.hbm [shape: f32[1,2048], index: 0, kind: input, shape index: {}]
  %s1 = inlined_call_operand.hbm [shape: f32[1,2048], index: 1, kind: output, shape index: {}]
  %s2 = sld [smem:[#allocation0]]
  $region18: #{tpu_custom_call.1} parent=0
    _
  %s4 = ssub.s32 1, %s2
  %s5 = scalar_select 0, %s4, %s2
  $region1: #{tpu_custom_call.1} parent=0
    #allocation2 [shape = 'u8[8192]{0}', space=vmem, size = 0x2000, scoped, tag = 'input window, operand 0, single buffered']
    #allocation3 [shape = 's32[1]{0}', space=sflag, size = 0x4, scoped, tag = 'scoped memory for tpu_custom_call.1']
    #allocation4 [shape = 's32[1]{0}', space=sflag, size = 0x4, scoped, tag = 'scoped memory for tpu_custom_call.1']
    #allocation5 [shape = 'u8[8192]{0}', space=vmem, size = 0x2000, scoped, tag = 'output window, operand 0, single buffered']
    %6 = vsyncpa [#allocation3], 0
    %7 = vsyncpa [#allocation4], 0
    // Predicated region
    $region2: #{tpu_custom_call.1} parent=1 // pred_check
      _
    $region3: #{tpu_custom_call.1} parent=1 // pred_check_branch
      %9 = sbr.rel (0) target = $region5
    $region4: #{tpu_custom_call.1} parent=1 // pred_region
      %s11 = ssub.s32 256, 256
      %12 = vsyncadd [#allocation3], %s11
      %s14 = sshll.u32 [#allocation2], 4
      %s15 = int_to_ptr.vmem [resolvable:$true] %s14
      %17 = dma.hbm_to_vmem [thread:$0]  %s0, 256, %s15, [#allocation3]
    $region5: #{tpu_custom_call.1} parent=1 // pred_fallthru
      _
    // Predicated region
    $region6: #{tpu_custom_call.1} parent=1 // pred_check
      _
    $region7: #{tpu_custom_call.1} parent=1 // pred_check_branch
      %19 = sbr.rel (0) target = $region9
    $region8: #{tpu_custom_call.1} parent=1 // pred_region
      %20 = dma.done [#allocation3], 256
    $region9: #{tpu_custom_call.1} parent=1 // pred_fallthru
      _
    %v21 = vld [vmem:[#allocation2] sm:$0xff]
    %v22 = vld [vmem:[#allocation2 + $0x8] sm:$0xff]
    %v23 = vxor.u32 %v21, 2147483648
    %v24 = vxor.u32 %v22, 2147483648
    %v25 = vmul.f32 %v23, 1.442695
    %v26 = vpow.pop %v25
    %v27 = vmul.f32 %v24, 1.442695
    %v28 = vpow.pop %v27
    %v29 = vadd.f32 %v26, 1.0
    %v30 = vadd.f32 %v28, 1.0
    %v31 = vrcp.pop %v29
    %v32 = vmul.f32 1.0, %v31
    %v33 = vrcp.pop %v30
    %v34 = vmul.f32 1.0, %v33
    %v35 = vmul.f32 %v21, %v32
    %v36 = vmul.f32 %v22, %v34
    %37 = vst [vmem:[#allocation5] sm:$0xff] %v35
    %38 = vst [vmem:[#allocation5 + $0x8] sm:$0xff] %v36
    // Predicated region
    $region10: #{tpu_custom_call.1} parent=1 // pred_check
      _
    $region11: #{tpu_custom_call.1} parent=1 // pred_check_branch
      %40 = sbr.rel (0) target = $region13
    $region12: #{tpu_custom_call.1} parent=1 // pred_region
      %s42 = ssub.s32 256, 256
      %43 = vsyncadd [#allocation4], %s42
      %s45 = sshll.u32 [#allocation5], 4
      %s46 = int_to_ptr.vmem [resolvable:$true] %s45
      %48 = dma.vmem_to_hbm [thread:$0]  %s46, 256, %s1, [#allocation4]
    $region13: #{tpu_custom_call.1} parent=1 // pred_fallthru
      _
    // Predicated region
    $region14: #{tpu_custom_call.1} parent=1 // pred_check
      _
    $region15: #{tpu_custom_call.1} parent=1 // pred_check_branch
      %50 = sbr.rel (0) target = $region17
    $region16: #{tpu_custom_call.1} parent=1 // pred_region
      %51 = dma.done [#allocation4], 256
    $region17: #{tpu_custom_call.1} parent=1 // pred_fallthru
      _
    %52 = vsyncpa [#allocation3], 1
    %53 = vsyncpa [#allocation4], 1

</llo_original>
